<compile_context>
chip_gen: v5e
topology: v5e:2x2
jax: 0.10.0
libtpu: 0.0.40
codegen_flags: <defaults>
</compile_context>

<pallas_src>
from functools import partial

import jax
import jax.numpy as jnp
from jax.experimental import pallas as pl
from jax.experimental.pallas import tpu as pltpu

HIDDEN = 16             # LSTM hidden size per direction
IN_FEATURES = 3         # LSTM input size
FC_IN = 2 * HIDDEN      # 32
OUT_CHANNELS = 2
GATE_ROWS = 6 * HIDDEN  # 96 = [i_f|i_b | g_f|g_b | o_f|o_b] (f-gate dropped)

LANE = 128              # TPU lane width; batch tiles are multiples of this


def _round_up(n, m):
    return ((n + m - 1) // m) * m


def _cdiv(a, b):
    return -(-a // b)


def _default_act_dtype():
    """bf16 activation math on v6e/v7x (bf16-capable VPU/EUP); f32 elsewhere."""
    try:
        kind = jax.devices()[0].device_kind.lower()
    except Exception:
        return jnp.float32
    if ("v6" in kind) or ("v7" in kind) or ("7x" in kind):
        return jnp.bfloat16
    return jnp.float32


def _sigmoid_via_tanh(z):
    # Exact: sigmoid(z) = 0.5 * (tanh(0.5*z) + 1)  -> single EUP op (vtanh)
    # instead of exp + reciprocal.
    return 0.5 * (jnp.tanh(0.5 * z) + 1.0)


def _fused_kernel(x_ref, wih_ref, bgate_ref, wfc_ref, bfc_ref, o_ref, *, act_dtype):
    # x_ref:     (3, TB)        float32, batch on the lane axis
    # wih_ref:   (96, 3)        repacked input->gate weights (i_f|i_b|g_f|g_b|o_f|o_b)
    # bgate_ref: (96, 1)        repacked (b_ih + b_hh) gate bias
    # wfc_ref:   (OUT, 32)      Linear weight (PyTorch layout)
    # bfc_ref:   (OUT, 1)       Linear bias
    # o_ref:     (OUT, TB)
    x = x_ref[...]

    # gates = W_ih @ x + b_ih + W_hh @ h0 + b_hh, with h0 = 0  ->  (96, TB)
    gates = jnp.dot(wih_ref[...], x, preferred_element_type=jnp.float32) + bgate_ref[...]
    # Activation math in act_dtype (bf16 on v6e/v7x, f32 on v5e).
    gates = gates.astype(act_dtype)

    # Gate blocks are 32 rows each (fwd|bwd per gate); f-gate omitted (c0 = 0).
    i = _sigmoid_via_tanh(gates[0:32, :])
    g = jnp.tanh(gates[32:64, :])
    o = _sigmoid_via_tanh(gates[64:96, :])

    # c1 = f*c0 + i*g = i*g ;  h1 = o * tanh(c1)  -> rows = [h_fwd(16) | h_bwd(16)]
    h = o * jnp.tanh(i * g)
    h = jnp.maximum(h, 0.0)                      # ReLU
    # TODO(synk): Dropout(p=0.2) is identity in eval mode; not applied here.

    # Cast the tiny (OUT, 32) weight to the activation dtype so the MXU sees
    # matching operands; accumulation stays f32.
    y = jnp.dot(wfc_ref[...].astype(act_dtype), h,
                preferred_element_type=jnp.float32) + bfc_ref[...]
    o_ref[...] = y.astype(o_ref.dtype)


@partial(jax.jit, static_argnames=("tb", "act_dtype"))
def fully_connected_forward(x, params, *, tb=8192, act_dtype=None):
    """x: (B, 3) float32 -> (B, OUT_CHANNELS) float32."""
    if act_dtype is None:
        act_dtype = _default_act_dtype()
    wih, bgate, wfc, bfc = params
    B = x.shape[0]

    # Feature-major, lane-dense layout: (3, B) in, (OUT, B) out.
    x_t = x.T

    # Batch tile: always a multiple of 128 lanes (BlockSpec divisibility rule),
    # capped so there are >=2 grid steps whenever >=2 lane-tiles of real work
    # exist (keeps both v7x TensorCores busy; harmless on single-TC chips).
    tb_r = max(LANE, _round_up(tb, LANE))
    n_lane_tiles = _cdiv(B, LANE)
    target_grid = min(2, n_lane_tiles)
    tile = min(tb_r, _cdiv(n_lane_tiles, target_grid) * LANE)
    b_pad = _round_up(B, tile)
    if b_pad != B:
        x_t = jnp.pad(x_t, ((0, 0), (0, b_pad - B)))
    grid = (b_pad // tile,)

    y_t = pl.pallas_call(
        partial(_fused_kernel, act_dtype=act_dtype),
        out_shape=jax.ShapeDtypeStruct((OUT_CHANNELS, b_pad), jnp.float32),
        grid_spec=pltpu.PrefetchScalarGridSpec(
            num_scalar_prefetch=0,
            grid=grid,
            in_specs=[
                # Activations: tiled over batch (lane axis).
                pl.BlockSpec((IN_FEATURES, tile), lambda i: (0, i)),
                # Weights/biases: full-array blocks, constant index -> stay resident.
                pl.BlockSpec((GATE_ROWS, IN_FEATURES), lambda i: (0, 0)),
                pl.BlockSpec((GATE_ROWS, 1), lambda i: (0, 0)),
                pl.BlockSpec((OUT_CHANNELS, FC_IN), lambda i: (0, 0)),
                pl.BlockSpec((OUT_CHANNELS, 1), lambda i: (0, 0)),
            ],
            out_specs=pl.BlockSpec((OUT_CHANNELS, tile), lambda i: (0, i)),
        ),
        compiler_params=pltpu.CompilerParams(
            dimension_semantics=("parallel",),  # shard batch tiles across TCs (v7x)
        ),
    )(x_t, wih, bgate, wfc, bfc)

    return y_t[:, :B].T


def init_params(key):
    """Deterministic init mirroring PyTorch's uniform(-1/sqrt(H), 1/sqrt(H)), then repacked."""
    ks = jax.random.split(key, 7)
    k_lstm = 1.0 / jnp.sqrt(jnp.float32(HIDDEN))
    k_fc = 1.0 / jnp.sqrt(jnp.float32(FC_IN))

    # LSTM per-direction parameters (PyTorch shapes, gate row order i, f, g, o).
    w_ih_f = jax.random.uniform(ks[0], (4 * HIDDEN, IN_FEATURES), jnp.float32, -k_lstm, k_lstm)
    w_ih_b = jax.random.uniform(ks[1], (4 * HIDDEN, IN_FEATURES), jnp.float32, -k_lstm, k_lstm)
    b_ih_f = jax.random.uniform(ks[2], (4 * HIDDEN,), jnp.float32, -k_lstm, k_lstm)
    b_hh_f = jax.random.uniform(ks[3], (4 * HIDDEN,), jnp.float32, -k_lstm, k_lstm)
    b_ih_b = jax.random.uniform(ks[4], (4 * HIDDEN,), jnp.float32, -k_lstm, k_lstm)
    b_hh_b = jax.random.uniform(ks[5], (4 * HIDDEN,), jnp.float32, -k_lstm, k_lstm)

    # Linear(32, OUT_CHANNELS)
    w_fc = jax.random.uniform(ks[6], (OUT_CHANNELS, FC_IN), jnp.float32, -k_fc, k_fc)
    b_fc = jnp.zeros((OUT_CHANNELS,), jnp.float32)

    # Repack gates feature-major as [i_fwd|i_bwd | g_fwd|g_bwd | o_fwd|o_bwd];
    # the f-gate is dropped (multiplies c0 = 0). Bias folds b_ih + b_hh.
    bias_f = b_ih_f + b_hh_f
    bias_b = b_ih_b + b_hh_b
    gate_slices = (slice(0, HIDDEN),               # i
                   slice(2 * HIDDEN, 3 * HIDDEN),  # g
                   slice(3 * HIDDEN, 4 * HIDDEN))  # o
    w_rows, b_rows = [], []
    for gs in gate_slices:
        w_rows += [w_ih_f[gs], w_ih_b[gs]]
        b_rows += [bias_f[gs], bias_b[gs]]
    wih = jnp.concatenate(w_rows, axis=0)                 # (96, 3)
    bgate = jnp.concatenate(b_rows, axis=0)[:, None]      # (96, 1)
    wfc = w_fc                                            # (OUT, 32)
    bfc = b_fc[:, None]                                   # (OUT, 1)
    return (wih, bgate, wfc, bfc)


def _reference(x, params):
    """Pure-JAX f32 reference of the same math, for correctness checking."""
    wih, bgate, wfc, bfc = params
    gates = x @ wih.T + bgate.T                           # (B, 96)
    i = jax.nn.sigmoid(gates[:, 0:32])
    g = jnp.tanh(gates[:, 32:64])
    o = jax.nn.sigmoid(gates[:, 64:96])
    h = jnp.maximum(o * jnp.tanh(i * g), 0.0)             # (B, 32) = [h_fwd|h_bwd]
    return h @ wfc.T + bfc.T                              # (B, OUT)


if __name__ == "__main__":
    key = jax.random.PRNGKey(0)
    kx, kp, kx2 = jax.random.split(key, 3)
    params = init_params(kp)

    default_dtype = _default_act_dtype()
    loose_tol = 3e-2 if default_dtype == jnp.bfloat16 else 1e-5

    # Small example consistent with the module: batch=2, in_channels=3.
    B = 2
    x = jax.random.normal(kx, (B, IN_FEATURES), jnp.float32)
    ref = _reference(x, params)

    # f32 activation path: exact (tanh-form sigmoid is mathematically identical).
    out_f32 = jax.block_until_ready(
        fully_connected_forward(x, params, act_dtype=jnp.float32))
    assert out_f32.shape == (B, OUT_CHANNELS), out_f32.shape
    assert jnp.allclose(out_f32, ref, atol=1e-5, rtol=1e-5)

    # Default path (bf16 activations on v6e/v7x, f32 on v5e).
    out = jax.block_until_ready(fully_connected_forward(x, params))
    assert out.shape == (B, OUT_CHANNELS), out.shape
    assert jnp.allclose(out, ref, atol=loose_tol, rtol=loose_tol)

    # Exercise multi-tile grid + tail padding (B not a multiple of the tile).
    B2 = 300
    x2 = jax.random.normal(kx2, (B2, IN_FEATURES), jnp.float32)
    out2 = jax.block_until_ready(fully_connected_forward(x2, params, tb=128))
    ref2 = _reference(x2, params)
    assert out2.shape == (B2, OUT_CHANNELS), out2.shape
    assert jnp.allclose(out2, ref2, atol=loose_tol, rtol=loose_tol)

    print("KERNEL_OK")
</pallas_src>

<mosaic_0001>
module attributes {stable_mosaic.version = 11 : i64} {
  func.func @_fused_kernel(%arg0: i32, %arg1: memref<3x128xf32, #tpu.memory_space<vmem>>, %arg2: memref<96x3xf32, #tpu.memory_space<vmem>>, %arg3: memref<96x1xf32, #tpu.memory_space<vmem>>, %arg4: memref<2x32xf32, #tpu.memory_space<vmem>>, %arg5: memref<2x1xf32, #tpu.memory_space<vmem>>, %arg6: memref<2x128xf32, #tpu.memory_space<vmem>>) attributes {dimension_semantics = [#tpu.dimension_semantics<parallel>], iteration_bounds = array<i64: 1>, scalar_prefetch = 0 : i64, scratch_operands = 0 : i64, tpu.core_type = #tpu.core_type<tc>, window_params = [{transform_indices = @transform_0, window_bounds = array<i64: 3, 128>}, {pipeline_mode = #tpu.pipeline_mode<synchronous>, transform_indices = @transform_1, window_bounds = array<i64: 96, 3>}, {pipeline_mode = #tpu.pipeline_mode<synchronous>, transform_indices = @transform_2, window_bounds = array<i64: 96, 1>}, {pipeline_mode = #tpu.pipeline_mode<synchronous>, transform_indices = @transform_3, window_bounds = array<i64: 2, 32>}, {pipeline_mode = #tpu.pipeline_mode<synchronous>, transform_indices = @transform_4, window_bounds = array<i64: 2, 1>}, {transform_indices = @transform_5, window_bounds = array<i64: 2, 128>}]} {
    %c0 = arith.constant 0 : index
    %c0_0 = arith.constant 0 : index
    %0 = vector.load %arg1[%c0, %c0_0] : memref<3x128xf32, #tpu.memory_space<vmem>>, vector<3x128xf32>
    %c0_1 = arith.constant 0 : index
    %c0_2 = arith.constant 0 : index
    %1 = vector.load %arg2[%c0_1, %c0_2] : memref<96x3xf32, #tpu.memory_space<vmem>>, vector<96x3xf32>
    %cst = arith.constant dense<0.000000e+00> : vector<96x128xf32>
    %2 = tpu.matmul %1, %0, %cst {dimension_numbers = #tpu.dot_dimension_numbers<[1], [0], [0], [1], [0, 0, 1, 1], [], []>} : vector<96x3xf32>, vector<3x128xf32>, vector<96x128xf32> -> vector<96x128xf32>
    %c0_3 = arith.constant 0 : index
    %c0_4 = arith.constant 0 : index
    %3 = vector.load %arg3[%c0_3, %c0_4] : memref<96x1xf32, #tpu.memory_space<vmem>>, vector<96x1xf32>
    %4 = vector.broadcast %3 : vector<96x1xf32> to vector<96x128xf32>
    %5 = arith.addf %2, %4 : vector<96x128xf32>
    %6 = vector.extract_strided_slice %5 {offsets = [0, 0], sizes = [32, 128], strides = [1, 1]} : vector<96x128xf32> to vector<32x128xf32>
    %cst_5 = arith.constant 5.000000e-01 : f32
    %7 = vector.broadcast %cst_5 : f32 to vector<32x128xf32>
    %8 = arith.mulf %7, %6 : vector<32x128xf32>
    %9 = math.tanh %8 : vector<32x128xf32>
    %cst_6 = arith.constant 1.000000e+00 : f32
    %10 = vector.broadcast %cst_6 : f32 to vector<32x128xf32>
    %11 = arith.addf %9, %10 : vector<32x128xf32>
    %cst_7 = arith.constant 5.000000e-01 : f32
    %12 = vector.broadcast %cst_7 : f32 to vector<32x128xf32>
    %13 = arith.mulf %12, %11 : vector<32x128xf32>
    %14 = vector.extract_strided_slice %5 {offsets = [32, 0], sizes = [32, 128], strides = [1, 1]} : vector<96x128xf32> to vector<32x128xf32>
    %15 = math.tanh %14 : vector<32x128xf32>
    %16 = vector.extract_strided_slice %5 {offsets = [64, 0], sizes = [32, 128], strides = [1, 1]} : vector<96x128xf32> to vector<32x128xf32>
    %cst_8 = arith.constant 5.000000e-01 : f32
    %17 = vector.broadcast %cst_8 : f32 to vector<32x128xf32>
    %18 = arith.mulf %17, %16 : vector<32x128xf32>
    %19 = math.tanh %18 : vector<32x128xf32>
    %cst_9 = arith.constant 1.000000e+00 : f32
    %20 = vector.broadcast %cst_9 : f32 to vector<32x128xf32>
    %21 = arith.addf %19, %20 : vector<32x128xf32>
    %cst_10 = arith.constant 5.000000e-01 : f32
    %22 = vector.broadcast %cst_10 : f32 to vector<32x128xf32>
    %23 = arith.mulf %22, %21 : vector<32x128xf32>
    %24 = arith.mulf %13, %15 : vector<32x128xf32>
    %25 = math.tanh %24 : vector<32x128xf32>
    %26 = arith.mulf %23, %25 : vector<32x128xf32>
    %cst_11 = arith.constant 0.000000e+00 : f32
    %27 = vector.broadcast %cst_11 : f32 to vector<32x128xf32>
    %28 = arith.maximumf %26, %27 : vector<32x128xf32>
    %c0_12 = arith.constant 0 : index
    %c0_13 = arith.constant 0 : index
    %29 = vector.load %arg4[%c0_12, %c0_13] : memref<2x32xf32, #tpu.memory_space<vmem>>, vector<2x32xf32>
    %cst_14 = arith.constant dense<0.000000e+00> : vector<2x128xf32>
    %30 = tpu.matmul %29, %28, %cst_14 {dimension_numbers = #tpu.dot_dimension_numbers<[1], [0], [0], [1], [0, 0, 1, 1], [], []>} : vector<2x32xf32>, vector<32x128xf32>, vector<2x128xf32> -> vector<2x128xf32>
    %c0_15 = arith.constant 0 : index
    %c0_16 = arith.constant 0 : index
    %31 = vector.load %arg5[%c0_15, %c0_16] : memref<2x1xf32, #tpu.memory_space<vmem>>, vector<2x1xf32>
    %32 = vector.broadcast %31 : vector<2x1xf32> to vector<2x128xf32>
    %33 = arith.addf %30, %32 : vector<2x128xf32>
    %c0_17 = arith.constant 0 : index
    %c0_18 = arith.constant 0 : index
    %34 = vector.load %arg6[%c0_17, %c0_18] : memref<2x128xf32, #tpu.memory_space<vmem>>, vector<2x128xf32>
    tpu.vector_store %arg6[%c0_17, %c0_18], %33 {strides = array<i32>} : memref<2x128xf32, #tpu.memory_space<vmem>>, vector<2x128xf32>,
    return
  }
  func.func @transform_0(%arg0: i32) -> (i32, i32) {
    %c0_i32 = arith.constant 0 : i32
    %c0_i32_0 = arith.constant 0 : i32
    return %c0_i32, %arg0 : i32, i32
  }
  func.func @transform_1(%arg0: i32) -> (i32, i32) {
    %c0_i32 = arith.constant 0 : i32
    %c0_i32_0 = arith.constant 0 : i32
    %c0_i32_1 = arith.constant 0 : i32
    return %c0_i32, %c0_i32_0 : i32, i32
  }
  func.func @transform_2(%arg0: i32) -> (i32, i32) {
    %c0_i32 = arith.constant 0 : i32
    %c0_i32_0 = arith.constant 0 : i32
    %c0_i32_1 = arith.constant 0 : i32
    return %c0_i32, %c0_i32_0 : i32, i32
  }
  func.func @transform_3(%arg0: i32) -> (i32, i32) {
    %c0_i32 = arith.constant 0 : i32
    %c0_i32_0 = arith.constant 0 : i32
    %c0_i32_1 = arith.constant 0 : i32
    return %c0_i32, %c0_i32_0 : i32, i32
  }
  func.func @transform_4(%arg0: i32) -> (i32, i32) {
    %c0_i32 = arith.constant 0 : i32
    %c0_i32_0 = arith.constant 0 : i32
    %c0_i32_1 = arith.constant 0 : i32
    return %c0_i32, %c0_i32_0 : i32, i32
  }
  func.func @transform_5(%arg0: i32) -> (i32, i32) {
    %c0_i32 = arith.constant 0 : i32
    %c0_i32_0 = arith.constant 0 : i32
    return %c0_i32, %arg0 : i32, i32
  }
}

</mosaic_0001>

<llo_original>
// kernel: fully_connected_forward.1
$region0: #{fully_connected_forward.1}
  #allocation0 [shape = 'u32[]', space=smem, size = 0x4, offset = 0x4, fixed_abs, tag = 'smem constant byte address 0x4 - core index']
  #allocation1 [shape = 'u32[72,128]{1,0:T(1,128)}', space=vmem, size = 0x9000, scoped, tag = 'internal scratch']
  %s0 = inlined_call_operand.vmem [shape: f32[3,128], index: 0, kind: input, shape index: {}]
  %s1 = inlined_call_operand.vmem [shape: f32[96,3], index: 1, kind: input, shape index: {}]
  %s2 = inlined_call_operand.vmem [shape: f32[96,1], index: 2, kind: input, shape index: {}]
  %s3 = inlined_call_operand.vmem [shape: f32[2,32], index: 3, kind: input, shape index: {}]
  %s4 = inlined_call_operand.vmem [shape: f32[2,1], index: 4, kind: input, shape index: {}]
  %s5 = inlined_call_operand.vmem [shape: f32[2,128], index: 5, kind: output, shape index: {}]
  %s6 = sld [smem:[#allocation0]]
  $region30: #{fully_connected_forward.1} parent=0
    _
  %s8 = ssub.s32 1, %s6
  %s9 = scalar_select 0, %s8, %s6
  // Predicated region
  $region2: #{fully_connected_forward.1} parent=0 // pred_check
    _
  $region3: #{fully_connected_forward.1} parent=0 // pred_check_branch
    %11 = sbr.rel (0) target = $region5
  $region4: #{fully_connected_forward.1} parent=0 // pred_region
    _
  $region5: #{fully_connected_forward.1} parent=0 // pred_fallthru
    _
  // Predicated region
  $region6: #{fully_connected_forward.1} parent=0 // pred_check
    _
  $region7: #{fully_connected_forward.1} parent=0 // pred_check_branch
    %13 = sbr.rel (0) target = $region9
  $region8: #{fully_connected_forward.1} parent=0 // pred_region
    _
  $region9: #{fully_connected_forward.1} parent=0 // pred_fallthru
    _
  // Predicated region
  $region10: #{fully_connected_forward.1} parent=0 // pred_check
    _
  $region11: #{fully_connected_forward.1} parent=0 // pred_check_branch
    %15 = sbr.rel (0) target = $region13
  $region12: #{fully_connected_forward.1} parent=0 // pred_region
    _
  $region13: #{fully_connected_forward.1} parent=0 // pred_fallthru
    _
  // Predicated region
  $region14: #{fully_connected_forward.1} parent=0 // pred_check
    _
  $region15: #{fully_connected_forward.1} parent=0 // pred_check_branch
    %17 = sbr.rel (0) target = $region17
  $region16: #{fully_connected_forward.1} parent=0 // pred_region
    _
  $region17: #{fully_connected_forward.1} parent=0 // pred_fallthru
    _
  // Predicated region
  $region18: #{fully_connected_forward.1} parent=0 // pred_check
    _
  $region19: #{fully_connected_forward.1} parent=0 // pred_check_branch
    %19 = sbr.rel (0) target = $region21
  $region20: #{fully_connected_forward.1} parent=0 // pred_region
    _
  $region21: #{fully_connected_forward.1} parent=0 // pred_fallthru
    _
  %v20 = vld [vmem:[%s0] sm:$0x7]
  %v21 = vld [vmem:[%s1] sm:$0xff]
  %v22 = vld [vmem:[%s1 + $0x8] sm:$0xff]
  %v23 = vld [vmem:[%s1 + $0x10] sm:$0xff]
  %v24 = vld [vmem:[%s1 + $0x18] sm:$0xff]
  %v25 = vld [vmem:[%s1 + $0x20] sm:$0xff]
  %v26 = vld [vmem:[%s1 + $0x28] sm:$0xff]
  %v27 = vld [vmem:[%s1 + $0x30] sm:$0xff]
  %v28 = vld [vmem:[%s1 + $0x38] sm:$0xff]
  %v29 = vld [vmem:[%s1 + $0x40] sm:$0xff]
  %v30 = vld [vmem:[%s1 + $0x48] sm:$0xff]
  %v31 = vld [vmem:[%s1 + $0x50] sm:$0xff]
  %v32 = vld [vmem:[%s1 + $0x58] sm:$0xff]
  %v33 = vld [vmem:[%s2] sm:$0xff]
  %v34 = vld [vmem:[%s2 + $0x8] sm:$0xff]
  %v35 = vld [vmem:[%s2 + $0x10] sm:$0xff]
  %v36 = vld [vmem:[%s2 + $0x18] sm:$0xff]
  %v37 = vld [vmem:[%s2 + $0x20] sm:$0xff]
  %v38 = vld [vmem:[%s2 + $0x28] sm:$0xff]
  %v39 = vld [vmem:[%s2 + $0x30] sm:$0xff]
  %v40 = vld [vmem:[%s2 + $0x38] sm:$0xff]
  %v41 = vld [vmem:[%s2 + $0x40] sm:$0xff]
  %v42 = vld [vmem:[%s2 + $0x48] sm:$0xff]
  %v43 = vld [vmem:[%s2 + $0x50] sm:$0xff]
  %v44 = vld [vmem:[%s2 + $0x58] sm:$0xff]
  %46 = vset.pattern.permute.xlu0 0
  %47 = vperm.xlu0 %46, %v33
  %v48 = vpop.permute.xlu0 %47
  %51 = vset.pattern.permute.xlu0 0
  %52 = vperm.xlu0 %51, %v34
  %v53 = vpop.permute.xlu0 %52
  %56 = vset.pattern.permute.xlu0 0
  %57 = vperm.xlu0 %56, %v35
  %v58 = vpop.permute.xlu0 %57
  %61 = vset.pattern.permute.xlu0 0
  %62 = vperm.xlu0 %61, %v36
  %v63 = vpop.permute.xlu0 %62
  %66 = vset.pattern.permute.xlu0 0
  %67 = vperm.xlu0 %66, %v37
  %v68 = vpop.permute.xlu0 %67
  %71 = vset.pattern.permute.xlu0 0
  %72 = vperm.xlu0 %71, %v38
  %v73 = vpop.permute.xlu0 %72
  %76 = vset.pattern.permute.xlu0 0
  %77 = vperm.xlu0 %76, %v39
  %v78 = vpop.permute.xlu0 %77
  %81 = vset.pattern.permute.xlu0 0
  %82 = vperm.xlu0 %81, %v40
  %v83 = vpop.permute.xlu0 %82
  %86 = vset.pattern.permute.xlu0 0
  %87 = vperm.xlu0 %86, %v41
  %v88 = vpop.permute.xlu0 %87
  %91 = vset.pattern.permute.xlu0 0
  %92 = vperm.xlu0 %91, %v42
  %v93 = vpop.permute.xlu0 %92
  %96 = vset.pattern.permute.xlu0 0
  %97 = vperm.xlu0 %96, %v43
  %v98 = vpop.permute.xlu0 %97
  %101 = vset.pattern.permute.xlu0 0
  %102 = vperm.xlu0 %101, %v44
  %v103 = vpop.permute.xlu0 %102
  %vm105 = vcmask 23552
  %v107 = vsel %vm105, %v21, 0
  %v110 = vsel %vm105, %v22, 0
  %v113 = vsel %vm105, %v23, 0
  %v116 = vsel %vm105, %v24, 0
  %v119 = vsel %vm105, %v25, 0
  %v122 = vsel %vm105, %v26, 0
  %v125 = vsel %vm105, %v27, 0
  %v128 = vsel %vm105, %v28, 0
  %v131 = vsel %vm105, %v29, 0
  %v134 = vsel %vm105, %v30, 0
  %v137 = vsel %vm105, %v31, 0
  %v140 = vsel %vm105, %v32, 0
  %vm142 = vcmask 1042432
  %v144 = vsel %vm142, %v20, 0
  %146 = vmatpush.msra.mxu0 0.0
  %147 = vmatpush.msra.mxu0 0.0
  %148 = vmatpush.msra.mxu0 0.0
  %149 = vmatpush.msra.mxu0 0.0
  %150 = vmatpush.msra.mxu0 0.0
  %151 = vmatpush.msra.mxu0 0.0
  %152 = vmatpush.msra.mxu0 0.0
  %153 = vmatpush.msra.mxu0 0.0
  %154 = vmatpush.msra.mxu0 0.0
  %155 = vmatpush.msra.mxu0 0.0
  %156 = vmatpush.msra.mxu0 0.0
  %157 = vmatpush.msra.mxu0 0.0
  %158 = vmatpush.msra.mxu0 0.0
  %159 = vmatpush.msra.mxu0 0.0
  %160 = vmatpush.msra.mxu0 0.0
  %161 = vmatpush.msra.mxu0 %v144
  %162 = vmatmul.f32.gmra.mxu0 %v107
  %v163 = vpop.f32.mrf.mxu0
  %v164 = vadd.f32 %v48, %v163
  %165 = vmatmul.f32.gmra.mxu0 %v110
  %v166 = vpop.f32.mrf.mxu0
  %v167 = vadd.f32 %v53, %v166
  %168 = vmatmul.f32.gmra.mxu0 %v113
  %v169 = vpop.f32.mrf.mxu0
  %v170 = vadd.f32 %v58, %v169
  %171 = vmatmul.f32.gmra.mxu0 %v116
  %v172 = vpop.f32.mrf.mxu0
  %v173 = vadd.f32 %v63, %v172
  %174 = vmatmul.f32.gmra.mxu0 %v119
  %v175 = vpop.f32.mrf.mxu0
  %v176 = vadd.f32 %v68, %v175
  %177 = vmatmul.f32.gmra.mxu0 %v122
  %v178 = vpop.f32.mrf.mxu0
  %v179 = vadd.f32 %v73, %v178
  %180 = vmatmul.f32.gmra.mxu0 %v125
  %v181 = vpop.f32.mrf.mxu0
  %v182 = vadd.f32 %v78, %v181
  %183 = vmatmul.f32.gmra.mxu0 %v128
  %v184 = vpop.f32.mrf.mxu0
  %v185 = vadd.f32 %v83, %v184
  %186 = vmatmul.f32.gmra.mxu0 %v131
  %v187 = vpop.f32.mrf.mxu0
  %v188 = vadd.f32 %v88, %v187
  %189 = vmatmul.f32.gmra.mxu0 %v134
  %v190 = vpop.f32.mrf.mxu0
  %v191 = vadd.f32 %v93, %v190
  %192 = vmatmul.f32.gmra.mxu0 %v137
  %v193 = vpop.f32.mrf.mxu0
  %v194 = vadd.f32 %v98, %v193
  %195 = vmatmul.f32.gmra.mxu0 %v140
  %v196 = vpop.f32.mrf.mxu0
  %v197 = vadd.f32 %v103, %v196
  %198 = vdwg.mxu0
  %v199 = vmul.f32 %v164, 0.5
  %v200 = vmul.f32 %v167, 0.5
  %v201 = vmul.f32 %v170, 0.5
  %v202 = vmul.f32 %v173, 0.5
  %v203 = vtanh.pop %v199
  %v204 = vtanh.pop %v200
  %v205 = vtanh.pop %v201
  %v206 = vtanh.pop %v202
  %v207 = vadd.f32 %v203, 1.0
  %v208 = vadd.f32 %v204, 1.0
  %v209 = vadd.f32 %v205, 1.0
  %v210 = vadd.f32 %v206, 1.0
  %v211 = vmul.f32 %v207, 0.5
  %v212 = vmul.f32 %v208, 0.5
  %v213 = vmul.f32 %v209, 0.5
  %v214 = vmul.f32 %v210, 0.5
  %v215 = vtanh.pop %v176
  %v216 = vtanh.pop %v179
  %v217 = vtanh.pop %v182
  %v218 = vtanh.pop %v185
  %v219 = vmul.f32 %v188, 0.5
  %v220 = vmul.f32 %v191, 0.5
  %v221 = vmul.f32 %v194, 0.5
  %v222 = vmul.f32 %v197, 0.5
  %v223 = vtanh.pop %v219
  %v224 = vtanh.pop %v220
  %v225 = vtanh.pop %v221
  %v226 = vtanh.pop %v222
  %v227 = vadd.f32 %v223, 1.0
  %v228 = vadd.f32 %v224, 1.0
  %v229 = vadd.f32 %v225, 1.0
  %v230 = vadd.f32 %v226, 1.0
  %v231 = vmul.f32 %v227, 0.5
  %v232 = vmul.f32 %v228, 0.5
  %v233 = vmul.f32 %v229, 0.5
  %v234 = vmul.f32 %v230, 0.5
  %v235 = vmul.f32 %v211, %v215
  %v236 = vmul.f32 %v212, %v216
  %v237 = vmul.f32 %v213, %v217
  %v238 = vmul.f32 %v214, %v218
  %v239 = vtanh.pop %v235
  %v240 = vtanh.pop %v236
  %v241 = vtanh.pop %v237
  %v242 = vtanh.pop %v238
  %v243 = vmul.f32 %v231, %v239
  %v244 = vmul.f32 %v232, %v240
  %v245 = vmul.f32 %v233, %v241
  %v246 = vmul.f32 %v234, %v242
  %v247 = vmax.f32 %v243, 0.0
  %v248 = vmax.f32 %v244, 0.0
  %v249 = vmax.f32 %v245, 0.0
  %v250 = vmax.f32 %v246, 0.0
  %v251 = vld [vmem:[%s3] sm:$0x3]
  %v252 = vld [vmem:[%s4] sm:$0x3]
  %254 = vset.pattern.permute.xlu0 0
  %255 = vperm.xlu0 %254, %v252
  %v256 = vpop.permute.xlu0 %255
  %vm258 = vcmask 261120
  %v260 = vsel %vm258, %v251, 0
  %262 = vmatpush.msra.mxu0 0.0
  %263 = vmatpush.msra.mxu0 0.0
  %264 = vmatpush.msra.mxu0 0.0
  %265 = vmatpush.msra.mxu0 0.0
  %266 = vmatpush.msra.mxu0 0.0
  %267 = vmatpush.msra.mxu0 0.0
  %268 = vmatpush.msra.mxu0 0.0
  %269 = vmatpush.msra.mxu0 0.0
  %270 = vmatpush.msra.mxu0 0.0
  %271 = vmatpush.msra.mxu0 0.0
  %272 = vmatpush.msra.mxu0 0.0
  %273 = vmatpush.msra.mxu0 0.0
  %274 = vmatpush.msra.mxu0 %v250
  %275 = vmatpush.msra.mxu0 %v249
  %276 = vmatpush.msra.mxu0 %v248
  %277 = vmatpush.msra.mxu0 %v247
  %278 = vmatmul.f32.gmra.mxu0 %v260
  %v279 = vpop.f32.mrf.mxu0
  %v280 = vadd.f32 %v256, %v279
  %281 = vdwg.mxu0
  %282 = vst [vmem:[%s5] sm:$0x3] %v280
  // Predicated region
  $region22: #{fully_connected_forward.1} parent=0 // pred_check
    _
  $region23: #{fully_connected_forward.1} parent=0 // pred_check_branch
    %284 = sbr.rel (0) target = $region25
  $region24: #{fully_connected_forward.1} parent=0 // pred_region
    _
  $region25: #{fully_connected_forward.1} parent=0 // pred_fallthru
    _
  // Predicated region
  $region26: #{fully_connected_forward.1} parent=0 // pred_check
    _
  $region27: #{fully_connected_forward.1} parent=0 // pred_check_branch
    %286 = sbr.rel (0) target = $region29
  $region28: #{fully_connected_forward.1} parent=0 // pred_region
    _
  $region29: #{fully_connected_forward.1} parent=0 // pred_fallthru
    _

</llo_original>
